<compile_context>
chip_gen: v7x
topology: tpu7x:2x2x1
jax: 0.10.0
libtpu: 0.0.40
codegen_flags: <defaults>
</compile_context>

<pallas_src>
import functools

import jax
import jax.numpy as jnp
from jax import lax
from jax.experimental import pallas as pl
from jax.experimental.pallas import tpu as pltpu


def _focal_loss_kernel(x_ref, t_ref, out_ref, acc_ref, *,
                       alpha, gamma, eps, num_classes, total_elems):
    k = pl.program_id(1)

    @pl.when(k == 0)
    def _():
        acc_ref[...] = jnp.zeros_like(acc_ref)

    x = x_ref[...].astype(jnp.float32)          # (C, tn)  classes on sublanes
    tgt = t_ref[...]                            # (1, tn)  int32 targets

    # softmax statistics over the class (sublane) axis
    m = jnp.max(x, axis=0, keepdims=True)                 # (1, tn)
    e = jnp.exp(x - m)                                     # (C, tn)
    denom = jnp.sum(e, axis=0, keepdims=True)              # (1, tn)

    # target-class numerator via one-hot select (no per-class log/pow/divide)
    classes = lax.broadcasted_iota(jnp.int32, x.shape, 0)            # (C, tn)
    sel = classes == tgt                                             # (C, tn)
    e_t = jnp.sum(jnp.where(sel, e, 0.0), axis=0, keepdims=True)     # (1, tn)

    # softmax prob at the target class, clipped exactly like the torch module
    p_t = jnp.clip(e_t / denom, eps, 1.0 - eps)                      # (1, tn)

    # per-sample alpha: class 0 -> (1-alpha), class 1 -> alpha, else 1.0;
    # out-of-range / padded targets -> 0 (all-zero one-hot => zero loss).
    valid = jnp.logical_and(tgt >= 0, tgt < num_classes)
    alpha_row = jnp.where(tgt == 0, 1.0 - alpha,
                          jnp.where(tgt == 1, alpha, 1.0))
    alpha_row = jnp.where(valid, alpha_row, 0.0)

    neg_log_pt = -jnp.log(p_t)
    one_m_p = 1.0 - p_t
    if gamma == 2.0:           # common case: (1-p)^2 == a single VPU multiply
        focal = one_m_p * one_m_p
    elif gamma == 1.0:
        focal = one_m_p
    elif gamma == 0.0:
        focal = jnp.ones_like(one_m_p)
    else:                      # generic float gamma; 1-p in [eps, 1-eps] > 0
        focal = jnp.exp(gamma * jnp.log(one_m_p))

    # lane-dense partial sums; no cross-lane reduce on the per-step path
    acc_ref[...] += alpha_row * neg_log_pt * focal

    @pl.when(k == pl.num_programs(1) - 1)
    def _():
        part = jnp.sum(acc_ref[...], axis=1, keepdims=True) / jnp.float32(total_elems)
        out_ref[...] = jnp.broadcast_to(part, (1, 128)).reshape(1, 1, 128)


def focal_loss(logits, target, *, alpha=0.25, gamma=2.0, eps=1e-7,
               max_tile_n=16 * 1024, vmem_limit_bytes=32 * 1024 * 1024):
    """logits: (N, C) float; target: (N,) int.

    Returns the scalar mean focal loss (mean over all N*C elements), matching
    the torch module's `loss.mean()`.
    """
    N, C = logits.shape
    itemsize = jnp.dtype(logits.dtype).itemsize

    # Lane-dense tiling along N.  Budget double-buffered inputs, the lane-dense
    # accumulator and elementwise temporaries against a conservative VMEM cap
    # (works within v5e's 16 MiB default and well under v7x's 64 MiB physical).
    bytes_per_lane = 2 * C * itemsize + 8 * C + 256
    budget = 8 * 1024 * 1024
    tile_n = max(128, min(max_tile_n, (budget // bytes_per_lane) // 128 * 128))
    tile_n = min(tile_n, pl.cdiv(N, 128) * 128)

    n_tiles = pl.cdiv(N, tile_n)
    num_par = 2 if n_tiles >= 2 else 1        # v7x: shard rows across both TCs
    steps = pl.cdiv(n_tiles, num_par)
    n_pad = num_par * steps * tile_n

    # Wrapper-side layout plumbing: (N, C) -> (C, N_pad). Padded columns get
    # target = -1 so they contribute exactly zero loss.
    x_t = jnp.pad(jnp.transpose(logits), ((0, 0), (0, n_pad - N)))
    tgt = jnp.pad(target.astype(jnp.int32).reshape(1, N),
                  ((0, 0), (0, n_pad - N)), constant_values=-1)

    kernel = functools.partial(
        _focal_loss_kernel,
        alpha=float(alpha), gamma=float(gamma), eps=float(eps),
        num_classes=C, total_elems=N * C)

    out = pl.pallas_call(
        kernel,
        out_shape=jax.ShapeDtypeStruct((num_par, 1, 128), jnp.float32),
        grid_spec=pltpu.PrefetchScalarGridSpec(
            num_scalar_prefetch=0,
            grid=(num_par, steps),
            in_specs=[
                pl.BlockSpec((C, tile_n), lambda p, k: (0, p * steps + k)),
                pl.BlockSpec((1, tile_n), lambda p, k: (0, p * steps + k)),
            ],
            out_specs=pl.BlockSpec((1, 1, 128), lambda p, k: (p, 0, 0)),
            scratch_shapes=[pltpu.VMEM((1, tile_n), jnp.float32)],
        ),
        compiler_params=pltpu.CompilerParams(
            dimension_semantics=("parallel", "arbitrary"),
            vmem_limit_bytes=vmem_limit_bytes),
    )(x_t, tgt)

    # sum the per-core partial means (num_par <= 2)
    return jnp.sum(out[:, 0, 0])


def _focal_loss_ref(logits, target, alpha=0.25, gamma=2.0, eps=1e-7):
    # Pure-JAX reference mirroring the torch forward exactly.
    N, C = logits.shape
    y = jax.nn.one_hot(target, C, dtype=jnp.float32)
    logit = jax.nn.softmax(logits.astype(jnp.float32), axis=-1)
    logit = jnp.clip(logit, eps, 1.0 - eps)
    alpha_vec = jnp.ones((N, C), jnp.float32)
    alpha_vec = alpha_vec.at[:, 0].mul(1.0 - alpha)
    alpha_vec = alpha_vec.at[:, 1].mul(alpha)
    alpha_row = (alpha_vec * y).sum(axis=1).reshape(-1, 1)
    loss = -1.0 * y * jnp.log(logit)
    loss = alpha_row * loss * (1.0 - logit) ** gamma
    return loss.mean()


if __name__ == "__main__":
    key = jax.random.PRNGKey(0)
    k1, k2 = jax.random.split(key)

    # small (N, C) classification logits, as the forward implies
    N, C = 64, 4
    logits = jax.random.normal(k1, (N, C), dtype=jnp.float32)
    target = jax.random.randint(k2, (N,), 0, C, dtype=jnp.int32)

    out = jax.block_until_ready(focal_loss(logits, target))
    ref = _focal_loss_ref(logits, target)
    assert jnp.allclose(out, ref, rtol=1e-5, atol=1e-6), (out, ref)

    # multi-tile / two-partial path with ragged N (forces grid=(2, steps))
    N2 = 400
    logits2 = jax.random.normal(k1, (N2, C), dtype=jnp.float32)
    target2 = jax.random.randint(k2, (N2,), 0, C, dtype=jnp.int32)
    out2 = jax.block_until_ready(focal_loss(logits2, target2, max_tile_n=128))
    ref2 = _focal_loss_ref(logits2, target2)
    assert jnp.allclose(out2, ref2, rtol=1e-5, atol=1e-6), (out2, ref2)

    print("KERNEL_OK")
</pallas_src>

<mosaic_0001>
module attributes {stable_mosaic.version = 11 : i64} {
  func.func @_focal_loss_kernel(%arg0: i32, %arg1: i32, %arg2: memref<4x128xf32, #tpu.memory_space<vmem>>, %arg3: memref<1x128xi32, #tpu.memory_space<vmem>>, %arg4: memref<1x1x128xf32, #tpu.memory_space<vmem>>, %arg5: memref<1x128xf32, #tpu.memory_space<vmem>>) attributes {dimension_semantics = [#tpu.dimension_semantics<parallel>, #tpu.dimension_semantics<arbitrary>], iteration_bounds = array<i64: 1, 1>, scalar_prefetch = 0 : i64, scratch_operands = 1 : i64, tpu.core_type = #tpu.core_type<tc>, window_params = [{transform_indices = @transform_0, window_bounds = array<i64: 4, 128>}, {transform_indices = @transform_1, window_bounds = array<i64: 1, 128>}, {transform_indices = @transform_2, window_bounds = array<i64: 1, 1, 128>}]} {
    %c0_i32 = arith.constant 0 : i32
    %0 = arith.cmpi eq, %arg1, %c0_i32 : i32
    %1 = arith.extui %0 : i1 to i32
    %c0_i32_0 = arith.constant 0 : i32
    %2 = arith.cmpi ne, %1, %c0_i32_0 : i32
    scf.if %2 {
      %cst_23 = arith.constant 0.000000e+00 : f32
      %54 = vector.broadcast %cst_23 : f32 to vector<1x128xf32>
      %c0_24 = arith.constant 0 : index
      %c0_25 = arith.constant 0 : index
      %55 = vector.load %arg5[%c0_24, %c0_25] : memref<1x128xf32, #tpu.memory_space<vmem>>, vector<1x128xf32>
      tpu.vector_store %arg5[%c0_24, %c0_25], %54 {strides = array<i32>} : memref<1x128xf32, #tpu.memory_space<vmem>>, vector<1x128xf32>,
    } else {
    }
    %c0 = arith.constant 0 : index
    %c0_1 = arith.constant 0 : index
    %3 = vector.load %arg2[%c0, %c0_1] : memref<4x128xf32, #tpu.memory_space<vmem>>, vector<4x128xf32>
    %c0_2 = arith.constant 0 : index
    %c0_3 = arith.constant 0 : index
    %4 = vector.load %arg3[%c0_2, %c0_3] : memref<1x128xi32, #tpu.memory_space<vmem>>, vector<1x128xi32>
    %cst = arith.constant dense<0xFF800000> : vector<128xf32>
    %5 = vector.multi_reduction <maximumf>, %3, %cst [0] : vector<4x128xf32> to vector<128xf32>
    %6 = vector.shape_cast %5 : vector<128xf32> to vector<1x128xf32>
    %7 = vector.broadcast %6 : vector<1x128xf32> to vector<4x128xf32>
    %8 = arith.subf %3, %7 : vector<4x128xf32>
    %9 = math.exp %8 : vector<4x128xf32>
    %cst_4 = arith.constant dense<0.000000e+00> : vector<128xf32>
    %10 = vector.multi_reduction <add>, %9, %cst_4 [0] : vector<4x128xf32> to vector<128xf32>
    %11 = vector.shape_cast %10 : vector<128xf32> to vector<1x128xf32>
    %12 = tpu.iota {dimensions = array<i32: 0>} : vector<4x128xi32>
    %13 = vector.broadcast %4 : vector<1x128xi32> to vector<4x128xi32>
    %14 = arith.cmpi eq, %12, %13 : vector<4x128xi32>
    %cst_5 = arith.constant 0.000000e+00 : f32
    %15 = vector.broadcast %cst_5 : f32 to vector<4x128xf32>
    %16 = arith.select %14, %9, %15 : vector<4x128xi1>, vector<4x128xf32>
    %cst_6 = arith.constant dense<0.000000e+00> : vector<128xf32>
    %17 = vector.multi_reduction <add>, %16, %cst_6 [0] : vector<4x128xf32> to vector<128xf32>
    %18 = vector.shape_cast %17 : vector<128xf32> to vector<1x128xf32>
    %19 = arith.divf %18, %11 : vector<1x128xf32>
    %cst_7 = arith.constant 1.000000e-07 : f32
    %cst_8 = arith.constant 0.99999988 : f32
    %20 = vector.broadcast %cst_7 : f32 to vector<1x128xf32>
    %21 = arith.maximumf %20, %19 : vector<1x128xf32>
    %22 = vector.broadcast %cst_8 : f32 to vector<1x128xf32>
    %23 = arith.minimumf %22, %21 : vector<1x128xf32>
    %c0_i32_9 = arith.constant 0 : i32
    %24 = vector.broadcast %c0_i32_9 : i32 to vector<1x128xi32>
    %25 = arith.cmpi sge, %4, %24 : vector<1x128xi32>
    %c4_i32 = arith.constant 4 : i32
    %26 = vector.broadcast %c4_i32 : i32 to vector<1x128xi32>
    %27 = arith.cmpi slt, %4, %26 : vector<1x128xi32>
    %28 = arith.andi %25, %27 : vector<1x128xi1>
    %c0_i32_10 = arith.constant 0 : i32
    %29 = vector.broadcast %c0_i32_10 : i32 to vector<1x128xi32>
    %30 = arith.cmpi eq, %4, %29 : vector<1x128xi32>
    %c1_i32 = arith.constant 1 : i32
    %31 = vector.broadcast %c1_i32 : i32 to vector<1x128xi32>
    %32 = arith.cmpi eq, %4, %31 : vector<1x128xi32>
    %cst_11 = arith.constant 2.500000e-01 : f32
    %cst_12 = arith.constant 1.000000e+00 : f32
    %33 = vector.broadcast %cst_11 : f32 to vector<1x128xf32>
    %34 = vector.broadcast %cst_12 : f32 to vector<1x128xf32>
    %35 = arith.select %32, %33, %34 : vector<1x128xi1>, vector<1x128xf32>
    %cst_13 = arith.constant 7.500000e-01 : f32
    %36 = vector.broadcast %cst_13 : f32 to vector<1x128xf32>
    %37 = arith.select %30, %36, %35 : vector<1x128xi1>, vector<1x128xf32>
    %cst_14 = arith.constant 0.000000e+00 : f32
    %38 = vector.broadcast %cst_14 : f32 to vector<1x128xf32>
    %39 = arith.select %28, %37, %38 : vector<1x128xi1>, vector<1x128xf32>
    %40 = math.log %23 : vector<1x128xf32>
    %cst_15 = arith.constant 0.000000e+00 : f32
    %41 = vector.broadcast %cst_15 : f32 to vector<1x128xf32>
    %42 = arith.subf %41, %40 : vector<1x128xf32>
    %cst_16 = arith.constant 1.000000e+00 : f32
    %43 = vector.broadcast %cst_16 : f32 to vector<1x128xf32>
    %44 = arith.subf %43, %23 : vector<1x128xf32>
    %45 = arith.mulf %44, %44 : vector<1x128xf32>
    %c0_17 = arith.constant 0 : index
    %c0_18 = arith.constant 0 : index
    %46 = vector.load %arg5[%c0_17, %c0_18] : memref<1x128xf32, #tpu.memory_space<vmem>>, vector<1x128xf32>
    %47 = arith.mulf %39, %42 : vector<1x128xf32>
    %48 = arith.mulf %47, %45 : vector<1x128xf32>
    %49 = arith.addf %46, %48 : vector<1x128xf32>
    %c0_19 = arith.constant 0 : index
    %c0_20 = arith.constant 0 : index
    %50 = vector.load %arg5[%c0_19, %c0_20] : memref<1x128xf32, #tpu.memory_space<vmem>>, vector<1x128xf32>
    tpu.vector_store %arg5[%c0_19, %c0_20], %49 {strides = array<i32>} : memref<1x128xf32, #tpu.memory_space<vmem>>, vector<1x128xf32>,
    %c0_i32_21 = arith.constant 0 : i32
    %51 = arith.cmpi eq, %arg1, %c0_i32_21 : i32
    %52 = arith.extui %51 : i1 to i32
    %c0_i32_22 = arith.constant 0 : i32
    %53 = arith.cmpi ne, %52, %c0_i32_22 : i32
    scf.if %53 {
      %c0_23 = arith.constant 0 : index
      %c0_24 = arith.constant 0 : index
      %54 = vector.load %arg5[%c0_23, %c0_24] : memref<1x128xf32, #tpu.memory_space<vmem>>, vector<1x128xf32>
      %cst_25 = arith.constant dense<0.000000e+00> : vector<1xf32>
      %55 = vector.multi_reduction <add>, %54, %cst_25 [1] : vector<1x128xf32> to vector<1xf32>
      %56 = vector.shape_cast %55 : vector<1xf32> to vector<1x1xf32>
      %cst_26 = arith.constant 2.560000e+02 : f32
      %57 = vector.broadcast %cst_26 : f32 to vector<1x1xf32>
      %58 = arith.divf %56, %57 : vector<1x1xf32>
      %59 = vector.shape_cast %58 : vector<1x1xf32> to vector<1x1xf32>
      %60 = vector.broadcast %59 : vector<1x1xf32> to vector<1x128xf32>
      %61 = vector.shape_cast %60 : vector<1x128xf32> to vector<1x1x128xf32>
      %c0_27 = arith.constant 0 : index
      %c0_28 = arith.constant 0 : index
      %c0_29 = arith.constant 0 : index
      %62 = vector.load %arg4[%c0_27, %c0_28, %c0_29] : memref<1x1x128xf32, #tpu.memory_space<vmem>>, vector<1x1x128xf32>
      tpu.vector_store %arg4[%c0_27, %c0_28, %c0_29], %61 {strides = array<i32>} : memref<1x1x128xf32, #tpu.memory_space<vmem>>, vector<1x1x128xf32>,
    } else {
    }
    return
  }
  func.func @transform_0(%arg0: i32, %arg1: i32) -> (i32, i32) {
    %c1_i32 = arith.constant 1 : i32
    %0 = arith.muli %arg0, %c1_i32 : i32
    %1 = arith.addi %0, %arg1 : i32
    %c0_i32 = arith.constant 0 : i32
    %c0_i32_0 = arith.constant 0 : i32
    return %c0_i32, %1 : i32, i32
  }
  func.func @transform_1(%arg0: i32, %arg1: i32) -> (i32, i32) {
    %c1_i32 = arith.constant 1 : i32
    %0 = arith.muli %arg0, %c1_i32 : i32
    %1 = arith.addi %0, %arg1 : i32
    %c0_i32 = arith.constant 0 : i32
    %c0_i32_0 = arith.constant 0 : i32
    return %c0_i32, %1 : i32, i32
  }
  func.func @transform_2(%arg0: i32, %arg1: i32) -> (i32, i32, i32) {
    %c0_i32 = arith.constant 0 : i32
    %c0_i32_0 = arith.constant 0 : i32
    %c0_i32_1 = arith.constant 0 : i32
    return %arg0, %c0_i32, %c0_i32_0 : i32, i32, i32
  }
}

</mosaic_0001>

<llo_original>
// kernel: tpu_custom_call.1
$region0: #{tpu_custom_call.1}
  #allocation0 [shape = 'u32[]', space=smem, size = 0x4, offset = 0x4, fixed_abs, tag = 'smem constant byte address 0x4 - core index']
  #allocation1 [shape = 'u32[144,128]{1,0:T(1,128)}', space=vmem, size = 0x12000, scoped, tag = 'internal scratch']
  #allocation2 [shape = 'f32[1,128]{1,0:T(1,128)}', space=vmem, size = 0x200, scoped, tag = 'scratch operand']
  %s0 = inlined_call_operand.hbm [shape: f32[4,128], index: 0, kind: input, shape index: {}]
  %s1 = inlined_call_operand.vmem [shape: s32[1,128], index: 1, kind: input, shape index: {}]
  %s2 = inlined_call_operand.hbm [shape: f32[1,1,128], index: 2, kind: output, shape index: {}]
  %s3 = sld [smem:[#allocation0]]
  $region30: #{tpu_custom_call.1} parent=0
    _
  %s5 = ssub.s32 1, %s3
  %s6 = scalar_select 0, %s5, %s3
  $region1: #{tpu_custom_call.1} parent=0
    #allocation3 [shape = 'u8[2048]{0}', space=vmem, size = 0x800, scoped, tag = 'input window, operand 0, single buffered']
    #allocation4 [shape = 's32[1]{0}', space=sflag, size = 0x4, scoped, tag = 'scoped memory for tpu_custom_call.1']
    #allocation5 [shape = 's32[1]{0}', space=sflag, size = 0x4, scoped, tag = 'scoped memory for tpu_custom_call.1']
    #allocation6 [shape = 'u8[512]{0}', space=vmem, size = 0x400, scoped, tag = 'output window, operand 0, single buffered']
    %7 = vsyncpa [#allocation4], 0
    %8 = vsyncpa [#allocation5], 0
    // Predicated region
    $region2: #{tpu_custom_call.1} parent=1 // pred_check
      _
    $region3: #{tpu_custom_call.1} parent=1 // pred_check_branch
      %10 = sbr.rel (0) target = $region5
    $region4: #{tpu_custom_call.1} parent=1 // pred_region
      %s11 = sadd.s32 0, 0
      %s13 = ssub.s32 64, 64
      %14 = vsyncadd [#allocation4], %s13
      %s15 = smul.addr %s11, 64
      %s16 = scalar_lea.hbm %s0, %s15
      %s18 = sshll.u32 [#allocation3], 4
      %s19 = int_to_ptr.vmem [resolvable:$true] %s18
      %21 = dma.hbm_to_vmem [thread:$0]  %s16, 64, %s19, [#allocation4]
    $region5: #{tpu_custom_call.1} parent=1 // pred_fallthru
      _
    // Predicated region
    $region6: #{tpu_custom_call.1} parent=1 // pred_check
      _
    $region7: #{tpu_custom_call.1} parent=1 // pred_check_branch
      %23 = sbr.rel (0) target = $region9
    $region8: #{tpu_custom_call.1} parent=1 // pred_region
      %s24 = sadd.s32 0, 0
      %p25 = scmp.lt.s32.totalorder %s24, 0
      %s26 = scalar_select %p25, %s24, 0
      %s27 = scalar_lea.vmem %s1, %s26
      %s28 = sadd.s32 0, 0
    $region9: #{tpu_custom_call.1} parent=1 // pred_fallthru
      _
    // Predicated region
    $region10: #{tpu_custom_call.1} parent=1 // pred_check
      _
    $region11: #{tpu_custom_call.1} parent=1 // pred_check_branch
      %30 = sbr.rel (0) target = $region13
    $region12: #{tpu_custom_call.1} parent=1 // pred_region
      %31 = dma.done [#allocation4], 64
    $region13: #{tpu_custom_call.1} parent=1 // pred_fallthru
      _
    %s32 = sadd.s32 0, 0
    %p33 = scmp.lt.s32.totalorder %s32, 0
    %s34 = scalar_select %p33, %s32, 0
    %s35 = scalar_lea.vmem %s1, %s34
    %s36 = sadd.s32 0, 0
    %s37 = sadd.s32 0, 0
    %p38 = scmp.lt.s32.totalorder %s37, 0
    %s39 = scalar_select %p38, %s37, 0
    %s40 = scalar_lea.vmem %s1, %s39
    %s41 = sadd.s32 0, 0
    %p42 = scmp.eq.s32.totalorder 0, 0
    // Predicated region
    $region14: #{tpu_custom_call.1} parent=1 // pred_check
      %p43 = pneg %p42
    $region15: #{tpu_custom_call.1} parent=1 // pred_check_branch
      %45 = sbr.rel (%p43) target = $region17
    $region16: #{tpu_custom_call.1} parent=1 // pred_region
      %46 = vst [vmem:[#allocation2] sm:$0x1] 0.0
    $region17: #{tpu_custom_call.1} parent=1 // pred_fallthru
      _
    %v47 = vld [vmem:[#allocation3] sm:$0xf]
    %v48 = vld [vmem:[%s40] sm:$0x1]
    %vm49 = vcmask 1043456
    %v50 = vsel %vm49, %v47, -inf
    %v51 = vrot.slane %v50, 4
    %v52 = vmax.f32 %v50, %v51
    %v53 = vrot.slane %v52, 2
    %v54 = vmax.f32 %v52, %v53
    %v55 = vrot.slane %v54, 1
    %v56 = vmax.f32 %v54, %v55
    %v57 = vsub.f32 %v47, %v56
    %v58 = vmul.f32 %v57, 1.442695
    %v59 = vpow.pop %v58
    %v60 = vsel %vm49, %v59, 0.0
    %v61 = vrot.slane %v60, 4
    %v62 = vadd.f32 %v60, %v61
    %v63 = vrot.slane %v62, 2
    %v64 = vadd.f32 %v62, %v63
    %v65 = vrot.slane %v64, 1
    %v66 = vadd.f32 %v64, %v65
    %v67 = vlaneseq
    %v68 = vshrl.u32 %v67, 7
    %v69 = vlaneseq
    %v70 = vshrl.u32 %v69, 7
    %v71 = vsub.s32 0, %v70
    %v72 = vrot.slane %v48, %v71
    %vm73 = vcmp.eq.s32.totalorder %v68, %v72
    %v74 = vsel %vm73, %v59, 0.0
    %v75 = vsel %vm49, %v74, 0.0
    %v76 = vrot.slane %v75, 4
    %v77 = vadd.f32 %v75, %v76
    %v78 = vrot.slane %v77, 2
    %v79 = vadd.f32 %v77, %v78
    %v80 = vrot.slane %v79, 1
    %v81 = vadd.f32 %v79, %v80
    %v82 = vrcp.pop %v66
    %v83 = vmul.f32 %v81, %v82
    %v84 = vmax.f32 %v83, 1e-07
    %v85 = vmin.f32 %v84, 0.9999999
    %vm86 = vcmp.ge.s32.totalorder %v48, 0
    %vm87 = vcmp.lt.s32.totalorder %v48, 4
    %vm88 = vmand %vm86, %vm87
    %vm89 = vcmp.eq.s32.totalorder %v48, 0
    %vm90 = vcmp.eq.s32.totalorder %v48, 1
    %v91 = vsel %vm90, 0.25, 1.0
    %v92 = vsel %vm89, 0.75, %v91
    %v93 = vsel %vm88, %v92, 0.0
    %v94 = vlog2.pop %v85
    %v95 = vmul.f32 %v94, 0.6931472
    %v96 = vsub.f32 0.0, %v95
    %v97 = vsub.f32 1.0, %v85
    %v98 = vmul.f32 %v97, %v97
    %v99 = vld [vmem:[#allocation2] sm:$0x1]
    %v100 = vmul.f32 %v93, %v96
    %v101 = vmul.f32 %v100, %v98
    %v102 = vadd.f32 %v99, %v101
    %103 = vst [vmem:[#allocation2] sm:$0x1] %v102
    // Predicated region
    $region18: #{tpu_custom_call.1} parent=1 // pred_check
      %p104 = pneg %p42
    $region19: #{tpu_custom_call.1} parent=1 // pred_check_branch
      %106 = sbr.rel (%p104) target = $region21
    $region20: #{tpu_custom_call.1} parent=1 // pred_region
      %v107 = vld [vmem:[#allocation2] sm:$0x1]
      %vm108 = vcmask 1040384
      %v109 = vsel %vm108, %v107, 0.0
      %110 = vadd.xlane.f32.xlu0 %v109
      %v111 = vpop.xlane.xlu0 %110
      %v112 = vrcp.pop 256.0
      %v113 = vmul.f32 %v111, %v112
      %114 = vst [vmem:[#allocation6] sm:$0x1] %v113
    $region21: #{tpu_custom_call.1} parent=1 // pred_fallthru
      _
    // Predicated region
    $region22: #{tpu_custom_call.1} parent=1 // pred_check
      _
    $region23: #{tpu_custom_call.1} parent=1 // pred_check_branch
      %116 = sbr.rel (0) target = $region25
    $region24: #{tpu_custom_call.1} parent=1 // pred_region
      %s118 = ssub.s32 16, 16
      %119 = vsyncadd [#allocation5], %s118
      %s121 = sshll.u32 [#allocation6], 4
      %s122 = int_to_ptr.vmem [resolvable:$true] %s121
      %124 = dma.vmem_to_hbm [thread:$0]  %s122, 16, %s2, [#allocation5]
    $region25: #{tpu_custom_call.1} parent=1 // pred_fallthru
      _
    // Predicated region
    $region26: #{tpu_custom_call.1} parent=1 // pred_check
      _
    $region27: #{tpu_custom_call.1} parent=1 // pred_check_branch
      %126 = sbr.rel (0) target = $region29
    $region28: #{tpu_custom_call.1} parent=1 // pred_region
      %127 = dma.done [#allocation5], 16
    $region29: #{tpu_custom_call.1} parent=1 // pred_fallthru
      _
    %128 = vsyncpa [#allocation4], 1
    %129 = vsyncpa [#allocation5], 1

</llo_original>
